<compile_context>
chip_gen: v7x
topology: tpu7x:2x2x1
jax: 0.10.0
libtpu: 0.0.40
codegen_flags: <defaults>
</compile_context>

<pallas_src>
import jax
import jax.numpy as jnp
from jax import lax
from jax.experimental import pallas as pl
from jax.experimental.pallas import tpu as pltpu

GEM_P = 3.0          # GeMP p
GEM_EPS = 1e-12      # GeMP eps (added AFTER the mean, exactly as in the spec)
BN_EPS = 1e-5        # nn.BatchNorm1d default eps
NORM_EPS = 1e-12     # F.normalize default eps
LANE = 128
HW_CHUNK = 32        # sublane chunk for the GeM reduction (16-64 band)


# --------------------------------------------------------------------------
# kernels
# --------------------------------------------------------------------------
def _gem_pool(feat_ref):
    """relu -> x**3 -> mean over HW -> (.+eps)**(1/3), chunked over HW.

    feat_ref: (bb, HW, C) Ref (bf16 or f32).  Returns (bb, C) f32.
    Chunking bounds the f32 temporaries to one (bb, chunk, C) slab instead of
    materializing full-tile upcasts (VMEM pressure / vreg spills at prod
    shapes like bb=8, HW~162, C=2048)."""
    bb, hw, c = feat_ref.shape
    chunk = HW_CHUNK if hw >= HW_CHUNK else hw
    nfull, rem = hw // chunk, hw % chunk

    def chunk_sum(x):
        x = jnp.maximum(x.astype(jnp.float32), 0.0)     # upcast + relu
        return jnp.sum(x * x * x, axis=1)               # VPU cube, sublane reduce

    def body(i, acc):
        off = i * chunk
        if chunk % 8 == 0:
            off = pl.multiple_of(off, 8)                 # aligned sublane slices
        return acc + chunk_sum(feat_ref[:, pl.ds(off, chunk), :])

    acc = jnp.zeros((bb, c), jnp.float32)
    acc = lax.fori_loop(0, nfull, body, acc, unroll=nfull <= 8)
    if rem:                                              # static remainder chunk
        acc = acc + chunk_sum(feat_ref[:, pl.ds(nfull * chunk, rem), :])
    mean = acc * (1.0 / hw)
    # cbrt only touches the tiny pooled (bb, C) result (EUP, negligible).
    return (mean + GEM_EPS) ** (1.0 / GEM_P)


def _eval_kernel(feat_ref, gamma_ref, beta_ref, rmean_ref, rvar_ref,
                 feat_l2_ref, bn_l2_ref):
    """Eval: relu -> GeMP -> BatchNorm1d(running stats) -> L2 normalize.
    Fully per-row, so it runs per batch tile; rows of a partial last tile are
    dropped by Pallas on the out-of-bounds store."""
    pooled = _gem_pool(feat_ref)                                  # (bb, C) f32
    bn = (pooled - rmean_ref[...]) * lax.rsqrt(rvar_ref[...] + BN_EPS)
    bn = bn * gamma_ref[...] + beta_ref[...]
    # F.normalize(x, p=2, dim=1) = x / max(||x||_2, eps); exact divide for
    # embedding parity (cost is negligible on the tiny (bb, C) result).
    feat_n = jnp.maximum(
        jnp.sqrt(jnp.sum(pooled * pooled, axis=1, keepdims=True)), NORM_EPS)
    bn_n = jnp.maximum(
        jnp.sqrt(jnp.sum(bn * bn, axis=1, keepdims=True)), NORM_EPS)
    feat_l2_ref[...] = pooled / feat_n
    bn_l2_ref[...] = bn / bn_n


def _pool_kernel(feat_ref, pooled_ref):
    """Training stage 1: relu -> GeMP per batch tile (the HBM-bound pass)."""
    pooled_ref[...] = _gem_pool(feat_ref)


def _train_head_kernel(pooled_ref, gamma_ref, beta_ref, w_ref, cls_ref, bn_ref):
    """Training stage 2: BatchNorm1d with batch statistics (couples every row,
    hence a single whole-array call) + bias-free classifier on the MXU."""
    pooled = pooled_ref[...]                                      # (B, C) f32
    mu = jnp.mean(pooled, axis=0, keepdims=True)
    var = jnp.mean((pooled - mu) ** 2, axis=0, keepdims=True)     # biased (PT fwd)
    bn = (pooled - mu) * lax.rsqrt(var + BN_EPS)
    bn = bn * gamma_ref[...] + beta_ref[...]
    bn_ref[...] = bn
    # classifier: (B, C) @ (C, Kp); bf16 operands (autocast-style, halves the
    # weight DMA), f32 accumulation; w was pre-transposed/lane-padded outside.
    cls_ref[...] = jnp.dot(bn.astype(w_ref.dtype), w_ref[...],
                           preferred_element_type=jnp.float32)


# --------------------------------------------------------------------------
# tiling / VMEM budgeting
# --------------------------------------------------------------------------
def _vmem_capacity_bytes():
    try:
        return int(pltpu.get_tpu_info().vmem_capacity_bytes)
    except Exception:                      # conservative: v7x per-core VMEM
        return 64 << 20


def _pick_batch_tile(batch, hw, c, in_itemsize, vmem_cap):
    """Batch-tile size: as big as the VMEM budget allows (fewer ~0.35us grid
    step overheads, bigger DMAs), a multiple of 8 (legal (bb, C) output
    blocks), and small enough that the 'parallel' grid keeps >= 4 steps when
    B allows so both v7x TensorCores get work."""
    if batch <= 8:
        return batch
    budget = vmem_cap // 3                       # leave room for temps/outputs
    per_row = 2 * hw * c * in_itemsize           # double-buffered input per row
    bb = int(min(16, max(8, budget // max(per_row, 1))))
    bb -= bb % 8
    while bb > 8 and pl.cdiv(batch, bb) < 4:
        bb -= 8
    return min(bb, batch)


def _vmem_limit_bytes(bb, hw, c, in_itemsize, n_out, vmem_cap):
    chunk = min(HW_CHUNK, hw)
    need = (2 * bb * hw * c * in_itemsize        # double-buffered feat tile
            + 4 * bb * chunk * c * 4             # chunked f32 temporaries
            + n_out * 2 * bb * c * 4             # double-buffered (bb, C) outputs
            + 16 * c * 4)                        # broadcast params + slack
    limit = max(2 * need, 32 << 20)              # 2x headroom, 32 MiB floor
    return int(min(limit, (vmem_cap * 7) // 8))


def _whole_vmem():
    return pl.BlockSpec(memory_space=pltpu.MemorySpace.VMEM)


# --------------------------------------------------------------------------
# forward wrapper
# --------------------------------------------------------------------------
def embed_net_forward(feat_nhwc, params, *, training=False):
    """embed_net.forward head, consuming the backbone feature map.

    feat_nhwc: (B, H, W, C) channels-last feature map (bf16 or f32,
    C == pool_dim).  Channels-last keeps C on the 128-lane axis with zero
    relayout cost; the reshape to (B, HW, C) is a contiguous merge (no copy).
    """
    B, H, W, C = feat_nhwc.shape
    HW = H * W
    feat_cl = feat_nhwc.reshape(B, HW, C)

    gamma = params["bn_gamma"].reshape(1, C).astype(jnp.float32)
    beta = params["bn_beta"].reshape(1, C).astype(jnp.float32)

    itemsize = feat_cl.dtype.itemsize
    vmem_cap = _vmem_capacity_bytes()
    bb = _pick_batch_tile(B, HW, C, itemsize, vmem_cap)
    grid = (pl.cdiv(B, bb),)     # partial last tile: OOB reads are garbage in
                                 # independent rows, OOB writes are dropped.
    feat_spec = pl.BlockSpec((bb, HW, C), lambda i: (i, 0, 0))
    # TODO(synk): if the feat DMA is still exposed at small bb, bump feat_spec
    #             to pipeline_mode=pl.Buffered(3) after re-checking VMEM.
    vec_spec = pl.BlockSpec((1, C), lambda i: (0, 0))
    out_vec_spec = pl.BlockSpec((bb, C), lambda i: (i, 0))
    feat_bytes = int(feat_cl.size) * itemsize

    if not training:
        rmean = params["bn_running_mean"].reshape(1, C).astype(jnp.float32)
        rvar = params["bn_running_var"].reshape(1, C).astype(jnp.float32)
        cparams = pltpu.CompilerParams(
            dimension_semantics=("parallel",),
            vmem_limit_bytes=_vmem_limit_bytes(bb, HW, C, itemsize, 2, vmem_cap))
        feat_l2, bn_l2 = pl.pallas_call(
            _eval_kernel,
            out_shape=(jax.ShapeDtypeStruct((B, C), jnp.float32),
                       jax.ShapeDtypeStruct((B, C), jnp.float32)),
            grid=grid,
            in_specs=[feat_spec, vec_spec, vec_spec, vec_spec, vec_spec],
            out_specs=(out_vec_spec, out_vec_spec),
            compiler_params=cparams,
            cost_estimate=pl.CostEstimate(
                flops=int(4 * B * HW * C + 16 * B * C),
                transcendentals=int(4 * B * C),
                bytes_accessed=int(feat_bytes + 2 * B * C * 4 + 4 * C * 4)),
        )(feat_cl, gamma, beta, rmean, rvar)
        return feat_l2, bn_l2

    # ---------------- training ----------------
    # Stage 1: batch-tiled, double-buffered relu + GeM pooling (HBM-bound).
    cparams = pltpu.CompilerParams(
        dimension_semantics=("parallel",),
        vmem_limit_bytes=_vmem_limit_bytes(bb, HW, C, itemsize, 1, vmem_cap))
    pooled = pl.pallas_call(
        _pool_kernel,
        out_shape=jax.ShapeDtypeStruct((B, C), jnp.float32),
        grid=grid,
        in_specs=[feat_spec],
        out_specs=out_vec_spec,
        compiler_params=cparams,
        cost_estimate=pl.CostEstimate(
            flops=int(4 * B * HW * C),
            transcendentals=int(B * C),
            bytes_accessed=int(feat_bytes + B * C * 4)),
    )(feat_cl)

    # Stage 2: BN (batch stats) + classifier on the tiny (B, C) matrix.
    w = params["cls_w"]                                           # (K, C)
    K = w.shape[0]
    Kp = ((K + LANE - 1) // LANE) * LANE                          # lane-pad classes
    if Kp != K:
        w = jnp.pad(w, ((0, Kp - K), (0, 0)))
    w_t = jnp.transpose(w).astype(jnp.bfloat16)                   # (C, Kp) bf16
    cls_pad, feat_bn = pl.pallas_call(
        _train_head_kernel,
        out_shape=(jax.ShapeDtypeStruct((B, Kp), jnp.float32),
                   jax.ShapeDtypeStruct((B, C), jnp.float32)),
        in_specs=[_whole_vmem()] * 4,
        out_specs=(_whole_vmem(), _whole_vmem()),
    )(pooled, gamma, beta, w_t)
    # TODO(synk): BatchNorm1d running-stat EMA updates are not produced.
    return {"cls_id": cls_pad[:, :K], "feat": feat_bn}


def init_params(key, pool_dim, class_num):
    k_g, k_m, k_v, k_w = jax.random.split(key, 4)
    return {
        # weights_init_kaiming for BN: weight ~ N(1, 0.01), bias = 0
        "bn_gamma": 1.0 + 0.01 * jax.random.normal(k_g, (pool_dim,), jnp.float32),
        "bn_beta": jnp.zeros((pool_dim,), jnp.float32),
        "bn_running_mean": 0.1 * jax.random.normal(k_m, (pool_dim,), jnp.float32),
        "bn_running_var": 1.0 + 0.1 * jax.random.uniform(k_v, (pool_dim,), jnp.float32),
        # weights_init_classifier: weight ~ N(0, 0.001), no bias
        "cls_w": 0.001 * jax.random.normal(k_w, (class_num, pool_dim), jnp.float32),
    }


if __name__ == "__main__":
    # Small shapes consistent with the module: pool_dim 2048 -> 128,
    # class_num -> 10, 8x8 spatial map, batch 16 (exercises a multi-step grid).
    B, C, H, W = 16, 128, 8, 8
    CLASS_NUM = 10

    key = jax.random.PRNGKey(0)
    k_feat, k_params = jax.random.split(key)
    # autocast-style reduced precision backbone output: bf16 DMA, f32 math.
    feat = jax.random.normal(k_feat, (B, H, W, C), jnp.float32).astype(jnp.bfloat16)
    params = init_params(k_params, C, CLASS_NUM)

    # eval branch: (F.normalize(feat), F.normalize(feat_after_BN))
    feat_l2, bn_l2 = embed_net_forward(feat, params, training=False)
    # training branch: {'cls_id', 'feat'}
    train_out = embed_net_forward(feat, params, training=True)
    jax.block_until_ready((feat_l2, bn_l2, train_out["cls_id"], train_out["feat"]))

    assert feat_l2.shape == (B, C) and bn_l2.shape == (B, C)
    assert train_out["cls_id"].shape == (B, CLASS_NUM)
    assert train_out["feat"].shape == (B, C)

    # ---- pure-JAX reference (same bf16 input, f32 math) ----
    def _ref(training):
        x = jnp.maximum(feat.astype(jnp.float32), 0.0).reshape(B, H * W, C)
        x3 = x * x * x
        pooled = (jnp.mean(x3, axis=1) + GEM_EPS) ** (1.0 / GEM_P)
        g, b = params["bn_gamma"], params["bn_beta"]
        if training:
            mu = jnp.mean(pooled, axis=0)
            var = jnp.mean((pooled - mu) ** 2, axis=0)
            bn = (pooled - mu) / jnp.sqrt(var + BN_EPS) * g + b
            cls = jnp.dot(bn.astype(jnp.bfloat16),
                          params["cls_w"].T.astype(jnp.bfloat16),
                          preferred_element_type=jnp.float32)
            return cls, bn
        bn = (pooled - params["bn_running_mean"]) / jnp.sqrt(
            params["bn_running_var"] + BN_EPS) * g + b
        nrm = lambda v: v / jnp.maximum(
            jnp.sqrt(jnp.sum(v * v, axis=1, keepdims=True)), NORM_EPS)
        return nrm(pooled), nrm(bn)

    r_feat_l2, r_bn_l2 = _ref(False)
    r_cls, r_bn = _ref(True)
    ok = (bool(jnp.allclose(feat_l2, r_feat_l2, rtol=5e-3, atol=1e-3))
          and bool(jnp.allclose(bn_l2, r_bn_l2, rtol=5e-3, atol=1e-3))
          and bool(jnp.allclose(train_out["feat"], r_bn, rtol=5e-3, atol=5e-3))
          and bool(jnp.allclose(train_out["cls_id"], r_cls, rtol=5e-2, atol=5e-3)))
    assert ok, "kernel outputs do not match the pure-JAX reference"
    print("KERNEL_OK")
</pallas_src>

<mosaic_0001>
module attributes {stable_mosaic.version = 11 : i64} {
  func.func @_eval_kernel(%arg0: i32, %arg1: memref<8x64x128xbf16, #tpu.memory_space<vmem>>, %arg2: memref<1x128xf32, #tpu.memory_space<vmem>>, %arg3: memref<1x128xf32, #tpu.memory_space<vmem>>, %arg4: memref<1x128xf32, #tpu.memory_space<vmem>>, %arg5: memref<1x128xf32, #tpu.memory_space<vmem>>, %arg6: memref<8x128xf32, #tpu.memory_space<vmem>>, %arg7: memref<8x128xf32, #tpu.memory_space<vmem>>) attributes {dimension_semantics = [#tpu.dimension_semantics<parallel>], iteration_bounds = array<i64: 2>, scalar_prefetch = 0 : i64, scratch_operands = 0 : i64, tpu.core_type = #tpu.core_type<tc>, window_params = [{transform_indices = @transform_0, window_bounds = array<i64: 8, 64, 128>}, {pipeline_mode = #tpu.pipeline_mode<synchronous>, transform_indices = @transform_1, window_bounds = array<i64: 1, 128>}, {pipeline_mode = #tpu.pipeline_mode<synchronous>, transform_indices = @transform_2, window_bounds = array<i64: 1, 128>}, {pipeline_mode = #tpu.pipeline_mode<synchronous>, transform_indices = @transform_3, window_bounds = array<i64: 1, 128>}, {pipeline_mode = #tpu.pipeline_mode<synchronous>, transform_indices = @transform_4, window_bounds = array<i64: 1, 128>}, {transform_indices = @transform_5, window_bounds = array<i64: 8, 128>}, {transform_indices = @transform_6, window_bounds = array<i64: 8, 128>}]} {
    %cst = arith.constant 0.000000e+00 : f32
    %0 = vector.broadcast %cst : f32 to vector<8x128xf32>
    %c0_i32 = arith.constant 0 : i32
    %c32_i32 = arith.constant 32 : i32
    %1 = arith.muli %c0_i32, %c32_i32 : i32
    %2 = tpu.assume_multiple %1, 8 : i32
    %c0 = arith.constant 0 : index
    %3 = arith.index_cast %2 : i32 to index
    %c0_0 = arith.constant 0 : index
    %4 = vector.load %arg1[%c0, %3, %c0_0] : memref<8x64x128xbf16, #tpu.memory_space<vmem>>, vector<8x32x128xbf16>
    %5 = arith.extf %4 : vector<8x32x128xbf16> to vector<8x32x128xf32>
    %cst_1 = arith.constant 0.000000e+00 : f32
    %6 = vector.broadcast %cst_1 : f32 to vector<8x32x128xf32>
    %7 = arith.maximumf %5, %6 : vector<8x32x128xf32>
    %8 = arith.mulf %7, %7 : vector<8x32x128xf32>
    %9 = arith.mulf %8, %7 : vector<8x32x128xf32>
    %cst_2 = arith.constant dense<0.000000e+00> : vector<8x128xf32>
    %10 = vector.multi_reduction <add>, %9, %cst_2 [1] : vector<8x32x128xf32> to vector<8x128xf32>
    %11 = arith.addf %0, %10 : vector<8x128xf32>
    %c1_i32 = arith.constant 1 : i32
    %c32_i32_3 = arith.constant 32 : i32
    %12 = arith.muli %c1_i32, %c32_i32_3 : i32
    %13 = tpu.assume_multiple %12, 8 : i32
    %c0_4 = arith.constant 0 : index
    %14 = arith.index_cast %13 : i32 to index
    %c0_5 = arith.constant 0 : index
    %15 = vector.load %arg1[%c0_4, %14, %c0_5] : memref<8x64x128xbf16, #tpu.memory_space<vmem>>, vector<8x32x128xbf16>
    %16 = arith.extf %15 : vector<8x32x128xbf16> to vector<8x32x128xf32>
    %cst_6 = arith.constant 0.000000e+00 : f32
    %17 = vector.broadcast %cst_6 : f32 to vector<8x32x128xf32>
    %18 = arith.maximumf %16, %17 : vector<8x32x128xf32>
    %19 = arith.mulf %18, %18 : vector<8x32x128xf32>
    %20 = arith.mulf %19, %18 : vector<8x32x128xf32>
    %cst_7 = arith.constant dense<0.000000e+00> : vector<8x128xf32>
    %21 = vector.multi_reduction <add>, %20, %cst_7 [1] : vector<8x32x128xf32> to vector<8x128xf32>
    %22 = arith.addf %11, %21 : vector<8x128xf32>
    %c2_i32 = arith.constant 2 : i32
    %cst_8 = arith.constant 1.562500e-02 : f32
    %23 = vector.broadcast %cst_8 : f32 to vector<8x128xf32>
    %24 = arith.mulf %22, %23 : vector<8x128xf32>
    %cst_9 = arith.constant 9.99999996E-13 : f32
    %25 = vector.broadcast %cst_9 : f32 to vector<8x128xf32>
    %26 = arith.addf %24, %25 : vector<8x128xf32>
    %cst_10 = arith.constant 0.333333343 : f32
    %27 = vector.broadcast %cst_10 : f32 to vector<8x128xf32>
    %28 = math.powf %26, %27 : vector<8x128xf32>
    %c0_11 = arith.constant 0 : index
    %c0_12 = arith.constant 0 : index
    %29 = vector.load %arg4[%c0_11, %c0_12] : memref<1x128xf32, #tpu.memory_space<vmem>>, vector<1x128xf32>
    %30 = vector.broadcast %29 : vector<1x128xf32> to vector<8x128xf32>
    %31 = arith.subf %28, %30 : vector<8x128xf32>
    %c0_13 = arith.constant 0 : index
    %c0_14 = arith.constant 0 : index
    %32 = vector.load %arg5[%c0_13, %c0_14] : memref<1x128xf32, #tpu.memory_space<vmem>>, vector<1x128xf32>
    %cst_15 = arith.constant 9.99999974E-6 : f32
    %33 = vector.broadcast %cst_15 : f32 to vector<1x128xf32>
    %34 = arith.addf %32, %33 : vector<1x128xf32>
    %35 = math.rsqrt %34 : vector<1x128xf32>
    %36 = vector.broadcast %35 : vector<1x128xf32> to vector<8x128xf32>
    %37 = arith.mulf %31, %36 : vector<8x128xf32>
    %c0_16 = arith.constant 0 : index
    %c0_17 = arith.constant 0 : index
    %38 = vector.load %arg2[%c0_16, %c0_17] : memref<1x128xf32, #tpu.memory_space<vmem>>, vector<1x128xf32>
    %39 = vector.broadcast %38 : vector<1x128xf32> to vector<8x128xf32>
    %40 = arith.mulf %37, %39 : vector<8x128xf32>
    %c0_18 = arith.constant 0 : index
    %c0_19 = arith.constant 0 : index
    %41 = vector.load %arg3[%c0_18, %c0_19] : memref<1x128xf32, #tpu.memory_space<vmem>>, vector<1x128xf32>
    %42 = vector.broadcast %41 : vector<1x128xf32> to vector<8x128xf32>
    %43 = arith.addf %40, %42 : vector<8x128xf32>
    %44 = arith.mulf %28, %28 : vector<8x128xf32>
    %cst_20 = arith.constant dense<0.000000e+00> : vector<8xf32>
    %45 = vector.multi_reduction <add>, %44, %cst_20 [1] : vector<8x128xf32> to vector<8xf32>
    %46 = vector.shape_cast %45 : vector<8xf32> to vector<8x1xf32>
    %47 = math.sqrt %46 : vector<8x1xf32>
    %cst_21 = arith.constant 9.99999996E-13 : f32
    %48 = vector.broadcast %cst_21 : f32 to vector<8x1xf32>
    %49 = arith.maximumf %47, %48 : vector<8x1xf32>
    %50 = arith.mulf %43, %43 : vector<8x128xf32>
    %cst_22 = arith.constant dense<0.000000e+00> : vector<8xf32>
    %51 = vector.multi_reduction <add>, %50, %cst_22 [1] : vector<8x128xf32> to vector<8xf32>
    %52 = vector.shape_cast %51 : vector<8xf32> to vector<8x1xf32>
    %53 = math.sqrt %52 : vector<8x1xf32>
    %cst_23 = arith.constant 9.99999996E-13 : f32
    %54 = vector.broadcast %cst_23 : f32 to vector<8x1xf32>
    %55 = arith.maximumf %53, %54 : vector<8x1xf32>
    %56 = vector.broadcast %49 : vector<8x1xf32> to vector<8x128xf32>
    %57 = arith.divf %28, %56 : vector<8x128xf32>
    %c0_24 = arith.constant 0 : index
    %c0_25 = arith.constant 0 : index
    %58 = vector.load %arg6[%c0_24, %c0_25] : memref<8x128xf32, #tpu.memory_space<vmem>>, vector<8x128xf32>
    tpu.vector_store %arg6[%c0_24, %c0_25], %57 {strides = array<i32>} : memref<8x128xf32, #tpu.memory_space<vmem>>, vector<8x128xf32>,
    %59 = vector.broadcast %55 : vector<8x1xf32> to vector<8x128xf32>
    %60 = arith.divf %43, %59 : vector<8x128xf32>
    %c0_26 = arith.constant 0 : index
    %c0_27 = arith.constant 0 : index
    %61 = vector.load %arg7[%c0_26, %c0_27] : memref<8x128xf32, #tpu.memory_space<vmem>>, vector<8x128xf32>
    tpu.vector_store %arg7[%c0_26, %c0_27], %60 {strides = array<i32>} : memref<8x128xf32, #tpu.memory_space<vmem>>, vector<8x128xf32>,
    return
  }
  func.func @transform_0(%arg0: i32) -> (i32, i32, i32) {
    %c0_i32 = arith.constant 0 : i32
    %c0_i32_0 = arith.constant 0 : i32
    %c0_i32_1 = arith.constant 0 : i32
    return %arg0, %c0_i32, %c0_i32_0 : i32, i32, i32
  }
  func.func @transform_1(%arg0: i32) -> (i32, i32) {
    %c0_i32 = arith.constant 0 : i32
    %c0_i32_0 = arith.constant 0 : i32
    %c0_i32_1 = arith.constant 0 : i32
    return %c0_i32, %c0_i32_0 : i32, i32
  }
  func.func @transform_2(%arg0: i32) -> (i32, i32) {
    %c0_i32 = arith.constant 0 : i32
    %c0_i32_0 = arith.constant 0 : i32
    %c0_i32_1 = arith.constant 0 : i32
    return %c0_i32, %c0_i32_0 : i32, i32
  }
  func.func @transform_3(%arg0: i32) -> (i32, i32) {
    %c0_i32 = arith.constant 0 : i32
    %c0_i32_0 = arith.constant 0 : i32
    %c0_i32_1 = arith.constant 0 : i32
    return %c0_i32, %c0_i32_0 : i32, i32
  }
  func.func @transform_4(%arg0: i32) -> (i32, i32) {
    %c0_i32 = arith.constant 0 : i32
    %c0_i32_0 = arith.constant 0 : i32
    %c0_i32_1 = arith.constant 0 : i32
    return %c0_i32, %c0_i32_0 : i32, i32
  }
  func.func @transform_5(%arg0: i32) -> (i32, i32) {
    %c0_i32 = arith.constant 0 : i32
    %c0_i32_0 = arith.constant 0 : i32
    return %arg0, %c0_i32 : i32, i32
  }
  func.func @transform_6(%arg0: i32) -> (i32, i32) {
    %c0_i32 = arith.constant 0 : i32
    %c0_i32_0 = arith.constant 0 : i32
    return %arg0, %c0_i32 : i32, i32
  }
}

</mosaic_0001>

<llo_original>
// kernel: tpu_custom_call.1
$region0: #{tpu_custom_call.1}
  #allocation0 [shape = 'u32[]', space=smem, size = 0x4, offset = 0x4, fixed_abs, tag = 'smem constant byte address 0x4 - core index']
  #allocation1 [shape = 'u32[144,128]{1,0:T(1,128)}', space=vmem, size = 0x12000, scoped, tag = 'internal scratch']
  %s0 = inlined_call_operand.hbm [shape: bf16[16,64,128], index: 0, kind: input, shape index: {}]
  %s1 = inlined_call_operand.vmem [shape: f32[1,128], index: 1, kind: input, shape index: {}]
  %s2 = inlined_call_operand.vmem [shape: f32[1,128], index: 2, kind: input, shape index: {}]
  %s3 = inlined_call_operand.vmem [shape: f32[1,128], index: 3, kind: input, shape index: {}]
  %s4 = inlined_call_operand.vmem [shape: f32[1,128], index: 4, kind: input, shape index: {}]
  %s5 = inlined_call_operand.hbm [shape: f32[16,128], index: 5, kind: output, shape index: {0}]
  %s6 = inlined_call_operand.hbm [shape: f32[16,128], index: 6, kind: output, shape index: {1}]
  %7 = xla_tuple %s5, %s6
  %s8 = sld [smem:[#allocation0]]
  $region65: #{tpu_custom_call.1} parent=0
    _
  %s10 = ssub.s32 1, %s8
  %s11 = scalar_select 0, %s10, %s8
  $region1: #{tpu_custom_call.1} parent=0
    #allocation2 [shape = 'u8[262144]{0}', space=vmem, size = 0x40000, scoped, tag = 'input window, operand 0']
    #allocation3 [shape = 's32[2]{0}', space=sflag, size = 0x8, scoped, tag = 'scoped memory for tpu_custom_call.1']
    #allocation4 [shape = 's32[2]{0}', space=sflag, size = 0x8, scoped, tag = 'scoped memory for tpu_custom_call.1']
    #allocation5 [shape = 'u8[8192]{0}', space=vmem, size = 0x2000, scoped, tag = 'output window, operand 0']
    #allocation6 [shape = 'u8[8192]{0}', space=vmem, size = 0x2000, scoped, tag = 'output window, operand 1']
    #allocation7 [shape = 's32[2]{0}', space=sflag, size = 0x8, scoped, tag = 'scoped memory for tpu_custom_call.1']
    %12 = vsyncpa [#allocation3], 0
    %s13 = scalar_lea.sflag [#allocation3], 1
    %14 = vsyncpa %s13, 0
    %15 = vsyncpa [#allocation4], 0
    %s16 = scalar_lea.sflag [#allocation4], 1
    %17 = vsyncpa %s16, 0
    %18 = vsyncpa [#allocation7], 0
    %s19 = scalar_lea.sflag [#allocation7], 1
    %20 = vsyncpa %s19, 0
    loop: start=0, step=1, limit=4
    $region2: #{tpu_custom_call.1} parent=1 // loop_pre_header
      _
    $region3: #{tpu_custom_call.1} parent=1 // loop_header
      %s22 = sphi 0, %s26
      %p23 = scmp.ge.s32.totalorder %s22, 4
      %s32 = sphi 0, %s34
      %s35 = sphi 0, %s32
      %s36 = sphi 0, %s35
      %s52 = sphi 0, %s36
      %s56 = sphi 0, %s56
      %s58 = sphi 0, %s56
      %s59 = sphi 0, %s58
      %s73 = sphi 0, %s59
      %s77 = sphi 0, %s77
      %s79 = sphi 0, %s77
      %s80 = sphi 0, %s79
      %s94 = sphi 0, %s80
      %s98 = sphi 0, %s98
      %s100 = sphi 0, %s98
      %s101 = sphi 0, %s100
      %s115 = sphi 0, %s101
      %s119 = sphi 0, %s119
      %s121 = sphi 0, %s119
      %s122 = sphi 0, %s121
      %s136 = sphi 0, %s122
      %s142 = sphi 0, %s144
      %s145 = sphi 0, %s142
      %s146 = sphi 0, %s145
      %s162 = sphi 0, %s146
      %s168 = sphi 0, %s170
      %s171 = sphi 0, %s168
      %s172 = sphi 0, %s171
      %s188 = sphi 0, %s172
    $region4: #{tpu_custom_call.1} parent=1 // loop_header_branch
      %25 = sbr.rel (%p23) target = $region8
    $region5: #{tpu_custom_call.1} parent=1 // loop_body
      %s27 = ssub.s32 %s22, 1
      %s28 = ssub.s32 %s22, 2
      %s29 = sadd.s32 %s22, 1
      %s30 = ssub.s32 %s22, %s29
      %p31 = scmp.eq.s32.totalorder %s30, 0
      %s33 = sadd.s32 %s32, 1
      %s34 = scalar_select %p31, %s32, %s33
      %p37 = pneg %p31
      %p38 = scmp.eq.s32.totalorder %s22, 1
      %p39 = por %p37, %p38
      %p40 = scmp.ne.s32.totalorder %s32, %s35
      %p41 = scmp.eq.s32.totalorder %s22, 0
      %p42 = por %p40, %p41
      %p43 = scmp.ne.s32.totalorder %s32, %s35
      %p44 = scmp.eq.s32.totalorder %s27, 1
      %p45 = por %p43, %p44
      %p46 = scmp.ne.s32.totalorder %s35, %s36
      %p47 = scmp.eq.s32.totalorder %s27, 0
      %p48 = por %p46, %p47
      %p49 = scmp.ne.s32.totalorder %s35, %s36
      %p50 = scmp.eq.s32.totalorder %s28, 1
      %p51 = por %p49, %p50
      %p53 = scmp.ne.s32.totalorder %s36, %s52
      %p54 = scmp.eq.s32.totalorder %s28, 0
      %p55 = por %p53, %p54
      %s57 = sadd.s32 %s56, 1
      %p60 = scmp.eq.s32.totalorder %s22, 1
      %p61 = scmp.ne.s32.totalorder %s56, %s58
      %p62 = scmp.eq.s32.totalorder %s22, 0
      %p63 = por %p61, %p62
      %p64 = scmp.ne.s32.totalorder %s56, %s58
      %p65 = scmp.eq.s32.totalorder %s27, 1
      %p66 = por %p64, %p65
      %p67 = scmp.ne.s32.totalorder %s58, %s59
      %p68 = scmp.eq.s32.totalorder %s27, 0
      %p69 = por %p67, %p68
      %p70 = scmp.ne.s32.totalorder %s58, %s59
      %p71 = scmp.eq.s32.totalorder %s28, 1
      %p72 = por %p70, %p71
      %p74 = scmp.ne.s32.totalorder %s59, %s73
      %p75 = scmp.eq.s32.totalorder %s28, 0
      %p76 = por %p74, %p75
      %s78 = sadd.s32 %s77, 1
      %p81 = scmp.eq.s32.totalorder %s22, 1
      %p82 = scmp.ne.s32.totalorder %s77, %s79
      %p83 = scmp.eq.s32.totalorder %s22, 0
      %p84 = por %p82, %p83
      %p85 = scmp.ne.s32.totalorder %s77, %s79
      %p86 = scmp.eq.s32.totalorder %s27, 1
      %p87 = por %p85, %p86
      %p88 = scmp.ne.s32.totalorder %s79, %s80
      %p89 = scmp.eq.s32.totalorder %s27, 0
      %p90 = por %p88, %p89
      %p91 = scmp.ne.s32.totalorder %s79, %s80
      %p92 = scmp.eq.s32.totalorder %s28, 1
      %p93 = por %p91, %p92
      %p95 = scmp.ne.s32.totalorder %s80, %s94
      %p96 = scmp.eq.s32.totalorder %s28, 0
      %p97 = por %p95, %p96
      %s99 = sadd.s32 %s98, 1
      %p102 = scmp.eq.s32.totalorder %s22, 1
      %p103 = scmp.ne.s32.totalorder %s98, %s100
      %p104 = scmp.eq.s32.totalorder %s22, 0
      %p105 = por %p103, %p104
      %p106 = scmp.ne.s32.totalorder %s98, %s100
      %p107 = scmp.eq.s32.totalorder %s27, 1
      %p108 = por %p106, %p107
      %p109 = scmp.ne.s32.totalorder %s100, %s101
      %p110 = scmp.eq.s32.totalorder %s27, 0
      %p111 = por %p109, %p110
      %p112 = scmp.ne.s32.totalorder %s100, %s101
      %p113 = scmp.eq.s32.totalorder %s28, 1
      %p114 = por %p112, %p113
      %p116 = scmp.ne.s32.totalorder %s101, %s115
      %p117 = scmp.eq.s32.totalorder %s28, 0
      %p118 = por %p116, %p117
      %s120 = sadd.s32 %s119, 1
      %p123 = scmp.eq.s32.totalorder %s22, 1
      %p124 = scmp.ne.s32.totalorder %s119, %s121
      %p125 = scmp.eq.s32.totalorder %s22, 0
      %p126 = por %p124, %p125
      %p127 = scmp.ne.s32.totalorder %s119, %s121
      %p128 = scmp.eq.s32.totalorder %s27, 1
      %p129 = por %p127, %p128
      %p130 = scmp.ne.s32.totalorder %s121, %s122
      %p131 = scmp.eq.s32.totalorder %s27, 0
      %p132 = por %p130, %p131
      %p133 = scmp.ne.s32.totalorder %s121, %s122
      %p134 = scmp.eq.s32.totalorder %s28, 1
      %p135 = por %p133, %p134
      %p137 = scmp.ne.s32.totalorder %s122, %s136
      %p138 = scmp.eq.s32.totalorder %s28, 0
      %p139 = por %p137, %p138
      %s140 = ssub.s32 %s22, %s29
      %p141 = scmp.eq.s32.totalorder %s140, 0
      %s143 = sadd.s32 %s142, 1
      %s144 = scalar_select %p141, %s142, %s143
      %p147 = pneg %p141
      %p148 = scmp.eq.s32.totalorder %s22, 1
      %p149 = por %p147, %p148
      %p150 = scmp.ne.s32.totalorder %s142, %s145
      %p151 = scmp.eq.s32.totalorder %s22, 0
      %p152 = por %p150, %p151
      %p153 = scmp.ne.s32.totalorder %s142, %s145
      %p154 = scmp.eq.s32.totalorder %s27, 1
      %p155 = por %p153, %p154
      %p156 = scmp.ne.s32.totalorder %s145, %s146
      %p157 = scmp.eq.s32.totalorder %s27, 0
      %p158 = por %p156, %p157
      %p159 = scmp.ne.s32.totalorder %s145, %s146
      %p160 = scmp.eq.s32.totalorder %s28, 1
      %p161 = por %p159, %p160
      %p163 = scmp.ne.s32.totalorder %s146, %s162
      %p164 = scmp.eq.s32.totalorder %s28, 0
      %p165 = por %p163, %p164
      %s166 = ssub.s32 %s22, %s29
      %p167 = scmp.eq.s32.totalorder %s166, 0
      %s169 = sadd.s32 %s168, 1
      %s170 = scalar_select %p167, %s168, %s169
      %p173 = pneg %p167
      %p174 = scmp.eq.s32.totalorder %s22, 1
      %p175 = por %p173, %p174
      %p176 = scmp.ne.s32.totalorder %s168, %s171
      %p177 = scmp.eq.s32.totalorder %s22, 0
      %p178 = por %p176, %p177
      %p179 = scmp.ne.s32.totalorder %s168, %s171
      %p180 = scmp.eq.s32.totalorder %s27, 1
      %p181 = por %p179, %p180
      %p182 = scmp.ne.s32.totalorder %s171, %s172
      %p183 = scmp.eq.s32.totalorder %s27, 0
      %p184 = por %p182, %p183
      %p185 = scmp.ne.s32.totalorder %s171, %s172
      %p186 = scmp.eq.s32.totalorder %s28, 1
      %p187 = por %p185, %p186
      %p189 = scmp.ne.s32.totalorder %s172, %s188
      %p190 = scmp.eq.s32.totalorder %s28, 0
      %p191 = por %p189, %p190
      %p192 = scmp.le.s32.totalorder 1, %s22
      %p193 = scmp.lt.s32.totalorder %s22, 3
      %p194 = pnand %p192, %p193
      %p195 = pneg %p194
      // Predicated region
      $region9: #{tpu_custom_call.1} parent=5 // pred_check
        _
      $region10: #{tpu_custom_call.1} parent=5 // pred_check_branch
        %197 = sbr.rel (%p194) target = $region12
      $region11: #{tpu_custom_call.1} parent=5 // pred_region
        %s198 = ssub.s32 %s22, 1
        // Predicated region
        $region13: #{tpu_custom_call.1} parent=11 // pred_check
          %p199 = pneg %p69
        $region14: #{tpu_custom_call.1} parent=11 // pred_check_branch
          %201 = sbr.rel (%p199) target = $region16
        $region15: #{tpu_custom_call.1} parent=11 // pred_region
          _
        $region16: #{tpu_custom_call.1} parent=11 // pred_fallthru
          _
        // Predicated region
        $region17: #{tpu_custom_call.1} parent=11 // pred_check
          %p202 = pneg %p90
        $region18: #{tpu_custom_call.1} parent=11 // pred_check_branch
          %204 = sbr.rel (%p202) target = $region20
        $region19: #{tpu_custom_call.1} parent=11 // pred_region
          _
        $region20: #{tpu_custom_call.1} parent=11 // pred_fallthru
          _
        // Predicated region
        $region21: #{tpu_custom_call.1} parent=11 // pred_check
          %p205 = pneg %p111
        $region22: #{tpu_custom_call.1} parent=11 // pred_check_branch
          %207 = sbr.rel (%p205) target = $region24
        $region23: #{tpu_custom_call.1} parent=11 // pred_region
          _
        $region24: #{tpu_custom_call.1} parent=11 // pred_fallthru
          _
        // Predicated region
        $region25: #{tpu_custom_call.1} parent=11 // pred_check
          %p208 = pneg %p132
        $region26: #{tpu_custom_call.1} parent=11 // pred_check_branch
          %210 = sbr.rel (%p208) target = $region28
        $region27: #{tpu_custom_call.1} parent=11 // pred_region
          _
        $region28: #{tpu_custom_call.1} parent=11 // pred_fallthru
          _
      $region12: #{tpu_custom_call.1} parent=5 // pred_fallthru
        _
      %p211 = scmp.lt.s32.totalorder %s22, 2
      // Predicated region
      $region29: #{tpu_custom_call.1} parent=5 // pred_check
        %p212 = pneg %p211
      $region30: #{tpu_custom_call.1} parent=5 // pred_check_branch
        %214 = sbr.rel (%p212) target = $region32
      $region31: #{tpu_custom_call.1} parent=5 // pred_region
        // Predicated region
        $region33: #{tpu_custom_call.1} parent=31 // pred_check
          %p215 = pneg %p42
        $region34: #{tpu_custom_call.1} parent=31 // pred_check_branch
          %217 = sbr.rel (%p215) target = $region36
        $region35: #{tpu_custom_call.1} parent=31 // pred_region
          %s218 = sand.u32 %s32, 1
          %s219 = scalar_lea.sflag [#allocation3], %s218
          %s220 = sand.u32 %s32, 1
          %s221 = smul.addr %s220, 256
          %s222 = scalar_lea.vmem [#allocation2], %s221
          %s223 = smul.u32 8, %s22
          %s225 = ssub.s32 4096, 4096
          %226 = vsyncadd %s219, %s225
          %s227 = smul.addr %s223, 8
          %s228 = smul.addr %s227, 64
          %s229 = scalar_lea.hbm %s0, %s228
          %s230 = sshll.u32 %s222, 4
          %s231 = int_to_ptr.vmem [resolvable:$true] %s230
          %236 = dma.hbm_to_vmem [thread:$0]  %s229, 4096, %s231, %s219, 64, 64, 4
        $region36: #{tpu_custom_call.1} parent=31 // pred_fallthru
          _
      $region32: #{tpu_custom_call.1} parent=5 // pred_fallthru
        _
      %p237 = scmp.le.s32.totalorder 1, %s22
      %p238 = scmp.lt.s32.totalorder %s22, 3
      %p239 = pnand %p237, %p238
      %p240 = pneg %p239
      // Predicated region
      $region37: #{tpu_custom_call.1} parent=5 // pred_check
        _
      $region38: #{tpu_custom_call.1} parent=5 // pred_check_branch
        %242 = sbr.rel (%p239) target = $region40
      $region39: #{tpu_custom_call.1} parent=5 // pred_region
        %s243 = ssub.s32 %s22, 1
        %s244 = sand.u32 %s35, 1
        %s245 = scalar_lea.sflag [#allocation3], %s244
        %s246 = sand.u32 %s35, 1
        %s247 = smul.addr %s246, 256
        %s248 = scalar_lea.vmem [#allocation2], %s247
        // Predicated region
        $region41: #{tpu_custom_call.1} parent=39 // pred_check
          %p249 = pneg %p48
        $region42: #{tpu_custom_call.1} parent=39 // pred_check_branch
          %251 = sbr.rel (%p249) target = $region44
        $region43: #{tpu_custom_call.1} parent=39 // pred_region
          %252 = dma.done %s245, 4096
        $region44: #{tpu_custom_call.1} parent=39 // pred_fallthru
          _
        %s253 = sand.u32 %s35, 1
        %s254 = scalar_lea.sflag [#allocation3], %s253
        %s255 = sand.u32 %s35, 1
        %s256 = smul.addr %s255, 256
        %s257 = scalar_lea.vmem [#allocation2], %s256
        %p258 = pneg %p48
        %p259 = pneg %p45
        %p260 = pneg %p69
        %p261 = pneg %p66
        %p262 = pneg %p90
        %p263 = pneg %p87
        %p264 = pneg %p111
        %p265 = pneg %p108
        %p266 = pneg %p132
        %p267 = pneg %p129
        %p268 = pneg %p158
        %p269 = pneg %p155
        %s270 = sand.u32 %s145, 1
        %s271 = scalar_lea.sflag [#allocation4], %s270
        %s272 = sand.u32 %s145, 1
        %s273 = smul.addr %s272, 8
        %s274 = scalar_lea.vmem [#allocation5], %s273
        %p275 = pneg %p184
        %p276 = pneg %p181
        %s277 = sand.u32 %s171, 1
        %s278 = scalar_lea.sflag [#allocation7], %s277
        %s279 = sand.u32 %s171, 1
        %s280 = smul.addr %s279, 8
        %s281 = scalar_lea.vmem [#allocation6], %s280
        %s282 = smul.u32 8, %s27
        %v283 = vld [vmem:[%s248] sm:$0xf]
        %v284 = vld [vmem:[%s248 + $0x4] sm:$0xf]
        %v285 = vld [vmem:[%s248 + $0x8] sm:$0xf]
        %v286 = vld [vmem:[%s248 + $0xc] sm:$0xf]
        %v287 = vld [vmem:[%s248 + $0x20] sm:$0xf]
        %v288 = vld [vmem:[%s248 + $0x24] sm:$0xf]
        %v289 = vld [vmem:[%s248 + $0x28] sm:$0xf]
        %v290 = vld [vmem:[%s248 + $0x2c] sm:$0xf]
        %v291 = vld [vmem:[%s248 + $0x40] sm:$0xf]
        %v292 = vld [vmem:[%s248 + $0x44] sm:$0xf]
        %v293 = vld [vmem:[%s248 + $0x48] sm:$0xf]
        %v294 = vld [vmem:[%s248 + $0x4c] sm:$0xf]
        %v295 = vld [vmem:[%s248 + $0x60] sm:$0xf]
        %v296 = vld [vmem:[%s248 + $0x64] sm:$0xf]
        %v297 = vld [vmem:[%s248 + $0x68] sm:$0xf]
        %v298 = vld [vmem:[%s248 + $0x6c] sm:$0xf]
        %v299 = vld [vmem:[%s248 + $0x80] sm:$0xf]
        %v300 = vld [vmem:[%s248 + $0x84] sm:$0xf]
        %v301 = vld [vmem:[%s248 + $0x88] sm:$0xf]
        %v302 = vld [vmem:[%s248 + $0x8c] sm:$0xf]
        %v303 = vld [vmem:[%s248 + $0xa0] sm:$0xf]
        %v304 = vld [vmem:[%s248 + $0xa4] sm:$0xf]
        %v305 = vld [vmem:[%s248 + $0xa8] sm:$0xf]
        %v306 = vld [vmem:[%s248 + $0xac] sm:$0xf]
        %v307 = vld [vmem:[%s248 + $0xc0] sm:$0xf]
        %v308 = vld [vmem:[%s248 + $0xc4] sm:$0xf]
        %v309 = vld [vmem:[%s248 + $0xc8] sm:$0xf]
        %v310 = vld [vmem:[%s248 + $0xcc] sm:$0xf]
        %v311 = vld [vmem:[%s248 + $0xe0] sm:$0xf]
        %v312 = vld [vmem:[%s248 + $0xe4] sm:$0xf]
        %v313 = vld [vmem:[%s248 + $0xe8] sm:$0xf]
        %v314 = vld [vmem:[%s248 + $0xec] sm:$0xf]
        %v315 = vunpack.c.l.bf16 %v283
        %v316 = vunpack.c.l.bf16 %v284
        %v317 = vunpack.c.l.bf16 %v285
        %v318 = vunpack.c.l.bf16 %v286
        %v319 = vunpack.c.l.bf16 %v287
        %v320 = vunpack.c.l.bf16 %v288
        %v321 = vunpack.c.l.bf16 %v289
        %v322 = vunpack.c.l.bf16 %v290
        %v323 = vunpack.c.l.bf16 %v291
        %v324 = vunpack.c.l.bf16 %v292
        %v325 = vunpack.c.l.bf16 %v293
        %v326 = vunpack.c.l.bf16 %v294
        %v327 = vunpack.c.l.bf16 %v295
        %v328 = vunpack.c.l.bf16 %v296
        %v329 = vunpack.c.l.bf16 %v297
        %v330 = vunpack.c.l.bf16 %v298
        %v331 = vunpack.c.l.bf16 %v299
        %v332 = vunpack.c.l.bf16 %v300
        %v333 = vunpack.c.l.bf16 %v301
        %v334 = vunpack.c.l.bf16 %v302
        %v335 = vunpack.c.l.bf16 %v303
        %v336 = vunpack.c.l.bf16 %v304
        %v337 = vunpack.c.l.bf16 %v305
        %v338 = vunpack.c.l.bf16 %v306
        %v339 = vunpack.c.l.bf16 %v307
        %v340 = vunpack.c.l.bf16 %v308
        %v341 = vunpack.c.l.bf16 %v309
        %v342 = vunpack.c.l.bf16 %v310
        %v343 = vunpack.c.l.bf16 %v311
        %v344 = vunpack.c.l.bf16 %v312
        %v345 = vunpack.c.l.bf16 %v313
        %v346 = vunpack.c.l.bf16 %v314
        %v347 = vmax.f32 %v315, 0.0
        %v348 = vmax.f32 %v316, 0.0
        %v349 = vmax.f32 %v317, 0.0
        %v350 = vmax.f32 %v318, 0.0
        %v351 = vmax.f32 %v319, 0.0
        %v352 = vmax.f32 %v320, 0.0
        %v353 = vmax.f32 %v321, 0.0
        %v354 = vmax.f32 %v322, 0.0
        %v355 = vmax.f32 %v323, 0.0
        %v356 = vmax.f32 %v324, 0.0
        %v357 = vmax.f32 %v325, 0.0
        %v358 = vmax.f32 %v326, 0.0
        %v359 = vmax.f32 %v327, 0.0
        %v360 = vmax.f32 %v328, 0.0
        %v361 = vmax.f32 %v329, 0.0
        %v362 = vmax.f32 %v330, 0.0
        %v363 = vmax.f32 %v331, 0.0
        %v364 = vmax.f32 %v332, 0.0
        %v365 = vmax.f32 %v333, 0.0
        %v366 = vmax.f32 %v334, 0.0
        %v367 = vmax.f32 %v335, 0.0
        %v368 = vmax.f32 %v336, 0.0
        %v369 = vmax.f32 %v337, 0.0
        %v370 = vmax.f32 %v338, 0.0
        %v371 = vmax.f32 %v339, 0.0
        %v372 = vmax.f32 %v340, 0.0
        %v373 = vmax.f32 %v341, 0.0
        %v374 = vmax.f32 %v342, 0.0
        %v375 = vmax.f32 %v343, 0.0
        %v376 = vmax.f32 %v344, 0.0
        %v377 = vmax.f32 %v345, 0.0
        %v378 = vmax.f32 %v346, 0.0
        %v379 = vmul.f32 %v347, %v347
        %v380 = vmul.f32 %v348, %v348
        %v381 = vmul.f32 %v349, %v349
        %v382 = vmul.f32 %v350, %v350
        %v383 = vmul.f32 %v351, %v351
        %v384 = vmul.f32 %v352, %v352
        %v385 = vmul.f32 %v353, %v353
        %v386 = vmul.f32 %v354, %v354
        %v387 = vmul.f32 %v355, %v355
        %v388 = vmul.f32 %v356, %v356
        %v389 = vmul.f32 %v357, %v357
        %v390 = vmul.f32 %v358, %v358
        %v391 = vmul.f32 %v359, %v359
        %v392 = vmul.f32 %v360, %v360
        %v393 = vmul.f32 %v361, %v361
        %v394 = vmul.f32 %v362, %v362
        %v395 = vmul.f32 %v363, %v363
        %v396 = vmul.f32 %v364, %v364
        %v397 = vmul.f32 %v365, %v365
        %v398 = vmul.f32 %v366, %v366
        %v399 = vmul.f32 %v367, %v367
        %v400 = vmul.f32 %v368, %v368
        %v401 = vmul.f32 %v369, %v369
        %v402 = vmul.f32 %v370, %v370
        %v403 = vmul.f32 %v371, %v371
        %v404 = vmul.f32 %v372, %v372
        %v405 = vmul.f32 %v373, %v373
        %v406 = vmul.f32 %v374, %v374
        %v407 = vmul.f32 %v375, %v375
        %v408 = vmul.f32 %v376, %v376
        %v409 = vmul.f32 %v377, %v377
        %v410 = vmul.f32 %v378, %v378
        %v411 = vmul.f32 %v379, %v347
        %v412 = vmul.f32 %v380, %v348
        %v413 = vmul.f32 %v381, %v349
        %v414 = vmul.f32 %v382, %v350
        %v415 = vmul.f32 %v383, %v351
        %v416 = vmul.f32 %v384, %v352
        %v417 = vmul.f32 %v385, %v353
        %v418 = vmul.f32 %v386, %v354
        %v419 = vmul.f32 %v387, %v355
        %v420 = vmul.f32 %v388, %v356
        %v421 = vmul.f32 %v389, %v357
        %v422 = vmul.f32 %v390, %v358
        %v423 = vmul.f32 %v391, %v359
        %v424 = vmul.f32 %v392, %v360
        %v425 = vmul.f32 %v393, %v361
        %v426 = vmul.f32 %v394, %v362
        %v427 = vmul.f32 %v395, %v363
        %v428 = vmul.f32 %v396, %v364
        %v429 = vmul.f32 %v397, %v365
        %v430 = vmul.f32 %v398, %v366
        %v431 = vmul.f32 %v399, %v367
        %v432 = vmul.f32 %v400, %v368
        %v433 = vmul.f32 %v401, %v369
        %v434 = vmul.f32 %v402, %v370
        %v435 = vmul.f32 %v403, %v371
        %v436 = vmul.f32 %v404, %v372
        %v437 = vmul.f32 %v405, %v373
        %v438 = vmul.f32 %v406, %v374
        %v439 = vmul.f32 %v407, %v375
        %v440 = vmul.f32 %v408, %v376
        %v441 = vmul.f32 %v409, %v377
        %v442 = vmul.f32 %v410, %v378
        %v443 = vadd.f32 %v411, %v412
        %v444 = vadd.f32 %v443, %v413
        %v445 = vadd.f32 %v444, %v414
        %v446 = vrot.slane %v445, 4
        %v447 = vadd.f32 %v445, %v446
        %v448 = vrot.slane %v447, 2
        %v449 = vadd.f32 %v447, %v448
        %v450 = vrot.slane %v449, 1
        %v451 = vadd.f32 %v449, %v450
        %v452 = vadd.f32 %v415, %v416
        %v453 = vadd.f32 %v452, %v417
        %v454 = vadd.f32 %v453, %v418
        %v455 = vrot.slane %v454, 4
        %v456 = vadd.f32 %v454, %v455
        %v457 = vrot.slane %v456, 2
        %v458 = vadd.f32 %v456, %v457
        %v459 = vrot.slane %v458, 1
        %v460 = vadd.f32 %v458, %v459
        %v461 = vadd.f32 %v419, %v420
        %v462 = vadd.f32 %v461, %v421
        %v463 = vadd.f32 %v462, %v422
        %v464 = vrot.slane %v463, 4
        %v465 = vadd.f32 %v463, %v464
        %v466 = vrot.slane %v465, 2
        %v467 = vadd.f32 %v465, %v466
        %v468 = vrot.slane %v467, 1
        %v469 = vadd.f32 %v467, %v468
        %v470 = vadd.f32 %v423, %v424
        %v471 = vadd.f32 %v470, %v425
        %v472 = vadd.f32 %v471, %v426
        %v473 = vrot.slane %v472, 4
        %v474 = vadd.f32 %v472, %v473
        %v475 = vrot.slane %v474, 2
        %v476 = vadd.f32 %v474, %v475
        %v477 = vrot.slane %v476, 1
        %v478 = vadd.f32 %v476, %v477
        %v479 = vadd.f32 %v427, %v428
        %v480 = vadd.f32 %v479, %v429
        %v481 = vadd.f32 %v480, %v430
        %v482 = vrot.slane %v481, 4
        %v483 = vadd.f32 %v481, %v482
        %v484 = vrot.slane %v483, 2
        %v485 = vadd.f32 %v483, %v484
        %v486 = vrot.slane %v485, 1
        %v487 = vadd.f32 %v485, %v486
        %v488 = vadd.f32 %v431, %v432
        %v489 = vadd.f32 %v488, %v433
        %v490 = vadd.f32 %v489, %v434
        %v491 = vrot.slane %v490, 4
        %v492 = vadd.f32 %v490, %v491
        %v493 = vrot.slane %v492, 2
        %v494 = vadd.f32 %v492, %v493
        %v495 = vrot.slane %v494, 1
        %v496 = vadd.f32 %v494, %v495
        %v497 = vadd.f32 %v435, %v436
        %v498 = vadd.f32 %v497, %v437
        %v499 = vadd.f32 %v498, %v438
        %v500 = vrot.slane %v499, 4
        %v501 = vadd.f32 %v499, %v500
        %v502 = vrot.slane %v501, 2
        %v503 = vadd.f32 %v501, %v502
        %v504 = vrot.slane %v503, 1
        %v505 = vadd.f32 %v503, %v504
        %v506 = vadd.f32 %v439, %v440
        %v507 = vadd.f32 %v506, %v441
        %v508 = vadd.f32 %v507, %v442
        %v509 = vrot.slane %v508, 4
        %v510 = vadd.f32 %v508, %v509
        %v511 = vrot.slane %v510, 2
        %v512 = vadd.f32 %v510, %v511
        %v513 = vrot.slane %v512, 1
        %v514 = vadd.f32 %v512, %v513
        %v515 = vadd.f32 %v451, 0.0
        %v516 = vadd.f32 %v460, 0.0
        %v517 = vadd.f32 %v469, 0.0
        %v518 = vadd.f32 %v478, 0.0
        %v519 = vadd.f32 %v487, 0.0
        %v520 = vadd.f32 %v496, 0.0
        %v521 = vadd.f32 %v505, 0.0
        %v522 = vadd.f32 %v514, 0.0
        %s523 = scalar_lea.vmem %s248, 16 [#allocation2]
        %v524 = vld [vmem:[%s523] sm:$0xf]
        %v525 = vld [vmem:[%s523 + $0x4] sm:$0xf]
        %v526 = vld [vmem:[%s523 + $0x8] sm:$0xf]
        %v527 = vld [vmem:[%s523 + $0xc] sm:$0xf]
        %v528 = vld [vmem:[%s523 + $0x20] sm:$0xf]
        %v529 = vld [vmem:[%s523 + $0x24] sm:$0xf]
        %v530 = vld [vmem:[%s523 + $0x28] sm:$0xf]
        %v531 = vld [vmem:[%s523 + $0x2c] sm:$0xf]
        %v532 = vld [vmem:[%s523 + $0x40] sm:$0xf]
        %v533 = vld [vmem:[%s523 + $0x44] sm:$0xf]
        %v534 = vld [vmem:[%s523 + $0x48] sm:$0xf]
        %v535 = vld [vmem:[%s523 + $0x4c] sm:$0xf]
        %v536 = vld [vmem:[%s523 + $0x60] sm:$0xf]
        %v537 = vld [vmem:[%s523 + $0x64] sm:$0xf]
        %v538 = vld [vmem:[%s523 + $0x68] sm:$0xf]
        %v539 = vld [vmem:[%s523 + $0x6c] sm:$0xf]
        %v540 = vld [vmem:[%s523 + $0x80] sm:$0xf]
        %v541 = vld [vmem:[%s523 + $0x84] sm:$0xf]
        %v542 = vld [vmem:[%s523 + $0x88] sm:$0xf]
        %v543 = vld [vmem:[%s523 + $0x8c] sm:$0xf]
        %v544 = vld [vmem:[%s523 + $0xa0] sm:$0xf]
        %v545 = vld [vmem:[%s523 + $0xa4] sm:$0xf]
        %v546 = vld [vmem:[%s523 + $0xa8] sm:$0xf]
        %v547 = vld [vmem:[%s523 + $0xac] sm:$0xf]
        %v548 = vld [vmem:[%s523 + $0xc0] sm:$0xf]
        %v549 = vld [vmem:[%s523 + $0xc4] sm:$0xf]
        %v550 = vld [vmem:[%s523 + $0xc8] sm:$0xf]
        %v551 = vld [vmem:[%s523 + $0xcc] sm:$0xf]
        %v552 = vld [vmem:[%s523 + $0xe0] sm:$0xf]
        %v553 = vld [vmem:[%s523 + $0xe4] sm:$0xf]
        %v554 = vld [vmem:[%s523 + $0xe8] sm:$0xf]
        %v555 = vld [vmem:[%s523 + $0xec] sm:$0xf]
        %v556 = vunpack.c.l.bf16 %v524
        %v557 = vunpack.c.l.bf16 %v525
        %v558 = vunpack.c.l.bf16 %v526
        %v559 = vunpack.c.l.bf16 %v527
        %v560 = vunpack.c.l.bf16 %v528
        %v561 = vunpack.c.l.bf16 %v529
        %v562 = vunpack.c.l.bf16 %v530
        %v563 = vunpack.c.l.bf16 %v531
        %v564 = vunpack.c.l.bf16 %v532
        %v565 = vunpack.c.l.bf16 %v533
        %v566 = vunpack.c.l.bf16 %v534
        %v567 = vunpack.c.l.bf16 %v535
        %v568 = vunpack.c.l.bf16 %v536
        %v569 = vunpack.c.l.bf16 %v537
        %v570 = vunpack.c.l.bf16 %v538
        %v571 = vunpack.c.l.bf16 %v539
        %v572 = vunpack.c.l.bf16 %v540
        %v573 = vunpack.c.l.bf16 %v541
        %v574 = vunpack.c.l.bf16 %v542
        %v575 = vunpack.c.l.bf16 %v543
        %v576 = vunpack.c.l.bf16 %v544
        %v577 = vunpack.c.l.bf16 %v545
        %v578 = vunpack.c.l.bf16 %v546
        %v579 = vunpack.c.l.bf16 %v547
        %v580 = vunpack.c.l.bf16 %v548
        %v581 = vunpack.c.l.bf16 %v549
        %v582 = vunpack.c.l.bf16 %v550
        %v583 = vunpack.c.l.bf16 %v551
        %v584 = vunpack.c.l.bf16 %v552
        %v585 = vunpack.c.l.bf16 %v553
        %v586 = vunpack.c.l.bf16 %v554
        %v587 = vunpack.c.l.bf16 %v555
        %v588 = vmax.f32 %v556, 0.0
        %v589 = vmax.f32 %v557, 0.0
        %v590 = vmax.f32 %v558, 0.0
        %v591 = vmax.f32 %v559, 0.0
        %v592 = vmax.f32 %v560, 0.0
        %v593 = vmax.f32 %v561, 0.0
        %v594 = vmax.f32 %v562, 0.0
        %v595 = vmax.f32 %v563, 0.0
        %v596 = vmax.f32 %v564, 0.0
        %v597 = vmax.f32 %v565, 0.0
        %v598 = vmax.f32 %v566, 0.0
        %v599 = vmax.f32 %v567, 0.0
        %v600 = vmax.f32 %v568, 0.0
        %v601 = vmax.f32 %v569, 0.0
        %v602 = vmax.f32 %v570, 0.0
        %v603 = vmax.f32 %v571, 0.0
        %v604 = vmax.f32 %v572, 0.0
        %v605 = vmax.f32 %v573, 0.0
        %v606 = vmax.f32 %v574, 0.0
        %v607 = vmax.f32 %v575, 0.0
        %v608 = vmax.f32 %v576, 0.0
        %v609 = vmax.f32 %v577, 0.0
        %v610 = vmax.f32 %v578, 0.0
        %v611 = vmax.f32 %v579, 0.0
        %v612 = vmax.f32 %v580, 0.0
        %v613 = vmax.f32 %v581, 0.0
        %v614 = vmax.f32 %v582, 0.0
        %v615 = vmax.f32 %v583, 0.0
        %v616 = vmax.f32 %v584, 0.0
        %v617 = vmax.f32 %v585, 0.0
        %v618 = vmax.f32 %v586, 0.0
        %v619 = vmax.f32 %v587, 0.0
        %v620 = vmul.f32 %v588, %v588
        %v621 = vmul.f32 %v589, %v589
        %v622 = vmul.f32 %v590, %v590
        %v623 = vmul.f32 %v591, %v591
        %v624 = vmul.f32 %v592, %v592
        %v625 = vmul.f32 %v593, %v593
        %v626 = vmul.f32 %v594, %v594
        %v627 = vmul.f32 %v595, %v595
        %v628 = vmul.f32 %v596, %v596
        %v629 = vmul.f32 %v597, %v597
        %v630 = vmul.f32 %v598, %v598
        %v631 = vmul.f32 %v599, %v599
        %v632 = vmul.f32 %v600, %v600
        %v633 = vmul.f32 %v601, %v601
        %v634 = vmul.f32 %v602, %v602
        %v635 = vmul.f32 %v603, %v603
        %v636 = vmul.f32 %v604, %v604
        %v637 = vmul.f32 %v605, %v605
        %v638 = vmul.f32 %v606, %v606
        %v639 = vmul.f32 %v607, %v607
        %v640 = vmul.f32 %v608, %v608
        %v641 = vmul.f32 %v609, %v609
        %v642 = vmul.f32 %v610, %v610
        %v643 = vmul.f32 %v611, %v611
        %v644 = vmul.f32 %v612, %v612
        %v645 = vmul.f32 %v613, %v613
        %v646 = vmul.f32 %v614, %v614
        %v647 = vmul.f32 %v615, %v615
        %v648 = vmul.f32 %v616, %v616
        %v649 = vmul.f32 %v617, %v617
        %v650 = vmul.f32 %v618, %v618
        %v651 = vmul.f32 %v619, %v619
        %v652 = vmul.f32 %v620, %v588
        %v653 = vmul.f32 %v621, %v589
        %v654 = vmul.f32 %v622, %v590
        %v655 = vmul.f32 %v623, %v591
        %v656 = vmul.f32 %v624, %v592
        %v657 = vmul.f32 %v625, %v593
        %v658 = vmul.f32 %v626, %v594
        %v659 = vmul.f32 %v627, %v595
        %v660 = vmul.f32 %v628, %v596
        %v661 = vmul.f32 %v629, %v597
        %v662 = vmul.f32 %v630, %v598
        %v663 = vmul.f32 %v631, %v599
        %v664 = vmul.f32 %v632, %v600
        %v665 = vmul.f32 %v633, %v601
        %v666 = vmul.f32 %v634, %v602
        %v667 = vmul.f32 %v635, %v603
        %v668 = vmul.f32 %v636, %v604
        %v669 = vmul.f32 %v637, %v605
        %v670 = vmul.f32 %v638, %v606
        %v671 = vmul.f32 %v639, %v607
        %v672 = vmul.f32 %v640, %v608
        %v673 = vmul.f32 %v641, %v609
        %v674 = vmul.f32 %v642, %v610
        %v675 = vmul.f32 %v643, %v611
        %v676 = vmul.f32 %v644, %v612
        %v677 = vmul.f32 %v645, %v613
        %v678 = vmul.f32 %v646, %v614
        %v679 = vmul.f32 %v647, %v615
        %v680 = vmul.f32 %v648, %v616
        %v681 = vmul.f32 %v649, %v617
        %v682 = vmul.f32 %v650, %v618
        %v683 = vmul.f32 %v651, %v619
        %v684 = vadd.f32 %v652, %v653
        %v685 = vadd.f32 %v684, %v654
        %v686 = vadd.f32 %v685, %v655
        %v687 = vrot.slane %v686, 4
        %v688 = vadd.f32 %v686, %v687
        %v689 = vrot.slane %v688, 2
        %v690 = vadd.f32 %v688, %v689
        %v691 = vrot.slane %v690, 1
        %v692 = vadd.f32 %v690, %v691
        %v693 = vadd.f32 %v656, %v657
        %v694 = vadd.f32 %v693, %v658
        %v695 = vadd.f32 %v694, %v659
        %v696 = vrot.slane %v695, 4
        %v697 = vadd.f32 %v695, %v696
        %v698 = vrot.slane %v697, 2
        %v699 = vadd.f32 %v697, %v698
        %v700 = vrot.slane %v699, 1
        %v701 = vadd.f32 %v699, %v700
        %v702 = vadd.f32 %v660, %v661
        %v703 = vadd.f32 %v702, %v662
        %v704 = vadd.f32 %v703, %v663
        %v705 = vrot.slane %v704, 4
        %v706 = vadd.f32 %v704, %v705
        %v707 = vrot.slane %v706, 2
        %v708 = vadd.f32 %v706, %v707
        %v709 = vrot.slane %v708, 1
        %v710 = vadd.f32 %v708, %v709
        %v711 = vadd.f32 %v664, %v665
        %v712 = vadd.f32 %v711, %v666
        %v713 = vadd.f32 %v712, %v667
        %v714 = vrot.slane %v713, 4
        %v715 = vadd.f32 %v713, %v714
        %v716 = vrot.slane %v715, 2
        %v717 = vadd.f32 %v715, %v716
        %v718 = vrot.slane %v717, 1
        %v719 = vadd.f32 %v717, %v718
        %v720 = vadd.f32 %v668, %v669
        %v721 = vadd.f32 %v720, %v670
        %v722 = vadd.f32 %v721, %v671
        %v723 = vrot.slane %v722, 4
        %v724 = vadd.f32 %v722, %v723
        %v725 = vrot.slane %v724, 2
        %v726 = vadd.f32 %v724, %v725
        %v727 = vrot.slane %v726, 1
        %v728 = vadd.f32 %v726, %v727
        %v729 = vadd.f32 %v672, %v673
        %v730 = vadd.f32 %v729, %v674
        %v731 = vadd.f32 %v730, %v675
        %v732 = vrot.slane %v731, 4
        %v733 = vadd.f32 %v731, %v732
        %v734 = vrot.slane %v733, 2
        %v735 = vadd.f32 %v733, %v734
        %v736 = vrot.slane %v735, 1
        %v737 = vadd.f32 %v735, %v736
        %v738 = vadd.f32 %v676, %v677
        %v739 = vadd.f32 %v738, %v678
        %v740 = vadd.f32 %v739, %v679
        %v741 = vrot.slane %v740, 4
        %v742 = vadd.f32 %v740, %v741
        %v743 = vrot.slane %v742, 2
        %v744 = vadd.f32 %v742, %v743
        %v745 = vrot.slane %v744, 1
        %v746 = vadd.f32 %v744, %v745
        %v747 = vadd.f32 %v680, %v681
        %v748 = vadd.f32 %v747, %v682
        %v749 = vadd.f32 %v748, %v683
        %v750 = vrot.slane %v749, 4
        %v751 = vadd.f32 %v749, %v750
        %v752 = vrot.slane %v751, 2
        %v753 = vadd.f32 %v751, %v752
        %v754 = vrot.slane %v753, 1
        %v755 = vadd.f32 %v753, %v754
        %v756 = vadd.f32 %v515, %v692
        %v757 = vadd.f32 %v516, %v701
        %v758 = vadd.f32 %v517, %v710
        %v759 = vadd.f32 %v518, %v719
        %v760 = vadd.f32 %v519, %v728
        %v761 = vadd.f32 %v520, %v737
        %v762 = vadd.f32 %v521, %v746
        %v763 = vadd.f32 %v522, %v755
        %v764 = vmul.f32 %v756, 0.015625
        %v765 = vmul.f32 %v757, 0.015625
        %v766 = vmul.f32 %v758, 0.015625
        %v767 = vmul.f32 %v759, 0.015625
        %v768 = vmul.f32 %v760, 0.015625
        %v769 = vmul.f32 %v761, 0.015625
        %v770 = vmul.f32 %v762, 0.015625
        %v771 = vmul.f32 %v763, 0.015625
        %v772 = vadd.f32 %v764, 1e-12
        %v773 = vadd.f32 %v765, 1e-12
        %v774 = vadd.f32 %v766, 1e-12
        %v775 = vadd.f32 %v767, 1e-12
        %v776 = vadd.f32 %v768, 1e-12
        %v777 = vadd.f32 %v769, 1e-12
        %v778 = vadd.f32 %v770, 1e-12
        %v779 = vadd.f32 %v771, 1e-12
        %v780 = vpow.f32 %v772, 0.33333334
        %v781 = vpow.f32 %v773, 0.33333334
        %v782 = vpow.f32 %v774, 0.33333334
        %v783 = vpow.f32 %v775, 0.33333334
        %v784 = vpow.f32 %v776, 0.33333334
        %v785 = vpow.f32 %v777, 0.33333334
        %v786 = vpow.f32 %v778, 0.33333334
        %v787 = vpow.f32 %v779, 0.33333334
        %v788 = vld [vmem:[%s3] sm:$0x1]
        %v790 = vlaneseq
        %v791 = vshrl.u32 %v790, 7
        %v792 = vsub.s32 0, %v791
        %v793 = vrot.slane %v788, %v792
        %v795 = vsub.f32 %v780, %v793
        %v796 = vsub.f32 %v781, %v793
        %v797 = vsub.f32 %v782, %v793
        %v798 = vsub.f32 %v783, %v793
        %v799 = vsub.f32 %v784, %v793
        %v800 = vsub.f32 %v785, %v793
        %v801 = vsub.f32 %v786, %v793
        %v802 = vsub.f32 %v787, %v793
        %v803 = vld [vmem:[%s4] sm:$0x1]
        %v804 = vadd.f32 %v803, 1e-05
        %v805 = vrsqrt.pop %v804
        %v807 = vlaneseq
        %v808 = vshrl.u32 %v807, 7
        %v809 = vsub.s32 0, %v808
        %v810 = vrot.slane %v805, %v809
        %v812 = vmul.f32 %v795, %v810
        %v813 = vmul.f32 %v796, %v810
        %v814 = vmul.f32 %v797, %v810
        %v815 = vmul.f32 %v798, %v810
        %v816 = vmul.f32 %v799, %v810
        %v817 = vmul.f32 %v800, %v810
        %v818 = vmul.f32 %v801, %v810
        %v819 = vmul.f32 %v802, %v810
        %v820 = vld [vmem:[%s1] sm:$0x1]
        %v822 = vlaneseq
        %v823 = vshrl.u32 %v822, 7
        %v824 = vsub.s32 0, %v823
        %v825 = vrot.slane %v820, %v824
        %v827 = vmul.f32 %v812, %v825
        %v828 = vmul.f32 %v813, %v825
        %v829 = vmul.f32 %v814, %v825
        %v830 = vmul.f32 %v815, %v825
        %v831 = vmul.f32 %v816, %v825
        %v832 = vmul.f32 %v817, %v825
        %v833 = vmul.f32 %v818, %v825
        %v834 = vmul.f32 %v819, %v825
        %v835 = vld [vmem:[%s2] sm:$0x1]
        %v837 = vlaneseq
        %v838 = vshrl.u32 %v837, 7
        %v839 = vsub.s32 0, %v838
        %v840 = vrot.slane %v835, %v839
        %v842 = vadd.f32 %v827, %v840
        %v843 = vadd.f32 %v828, %v840
        %v844 = vadd.f32 %v829, %v840
        %v845 = vadd.f32 %v830, %v840
        %v846 = vadd.f32 %v831, %v840
        %v847 = vadd.f32 %v832, %v840
        %v848 = vadd.f32 %v833, %v840
        %v849 = vadd.f32 %v834, %v840
        %v850 = vmul.f32 %v780, %v780
        %v851 = vmul.f32 %v781, %v781
        %v852 = vmul.f32 %v782, %v782
        %v853 = vmul.f32 %v783, %v783
        %v854 = vmul.f32 %v784, %v784
        %v855 = vmul.f32 %v785, %v785
        %v856 = vmul.f32 %v786, %v786
        %v857 = vmul.f32 %v787, %v787
        %vm866 = vcmask 1041409
        %v867 = vsel %vm866, %v851, %v850
        %vm868 = vcmask 1042434
        %v869 = vsel %vm868, %v852, %v867
        %vm870 = vcmask 1043459
        %v871 = vsel %vm870, %v853, %v869
        %vm872 = vcmask 1044484
        %v873 = vsel %vm872, %v854, %v871
        %vm874 = vcmask 1045509
        %v875 = vsel %vm874, %v855, %v873
        %vm876 = vcmask 1046534
        %v877 = vsel %vm876, %v856, %v875
        %vm878 = vcmask 1047559
        %v879 = vsel %vm878, %v857, %v877
        %881 = vadd.xlane.f32.xlu0 %v879
        %v882 = vpop.xlane.xlu0 %881
        %v883 = vrsqrt.pop %v882
        %v884 = vmul.f32 %v882, %v883
        %vm885 = vcmp.eq.f32.partialorder %v882, inf
        %v886 = vsel %vm885, %v882, %v884
        %vm887 = vcmp.eq.f32.partialorder %v882, 0.0
        %v888 = vand.u32 %v882, 2147483648
        %v889 = vsel %vm887, %v888, %v886
        %v890 = vmax.f32 %v889, 1e-12
        %v891 = vmul.f32 %v842, %v842
        %v892 = vmul.f32 %v843, %v843
        %v893 = vmul.f32 %v844, %v844
        %v894 = vmul.f32 %v845, %v845
        %v895 = vmul.f32 %v846, %v846
        %v896 = vmul.f32 %v847, %v847
        %v897 = vmul.f32 %v848, %v848
        %v898 = vmul.f32 %v849, %v849
        %v907 = vrot.slane %v892, 7
        %v908 = vsel %vm866, %v907, %v891
        %v909 = vrot.slane %v893, 6
        %v910 = vsel %vm868, %v909, %v908
        %v911 = vrot.slane %v894, 5
        %v912 = vsel %vm870, %v911, %v910
        %v913 = vrot.slane %v895, 4
        %v914 = vsel %vm872, %v913, %v912
        %v915 = vrot.slane %v896, 3
        %v916 = vsel %vm874, %v915, %v914
        %v917 = vrot.slane %v897, 2
        %v918 = vsel %vm876, %v917, %v916
        %v919 = vrot.slane %v898, 1
        %v920 = vsel %vm878, %v919, %v918
        %922 = vadd.xlane.f32.xlu0 %v920
        %v923 = vpop.xlane.xlu0 %922
        %v924 = vrsqrt.pop %v923
        %v925 = vmul.f32 %v923, %v924
        %vm926 = vcmp.eq.f32.partialorder %v923, inf
        %v927 = vsel %vm926, %v923, %v925
        %vm928 = vcmp.eq.f32.partialorder %v923, 0.0
        %v929 = vand.u32 %v923, 2147483648
        %v930 = vsel %vm928, %v929, %v927
        %v931 = vmax.f32 %v930, 1e-12
        %v933 = vrot.slane %v890, 1
        %v934 = vrot.slane %v890, 2
        %v935 = vrot.slane %v890, 3
        %v936 = vrot.slane %v890, 4
        %v937 = vrot.slane %v890, 5
        %v938 = vrot.slane %v890, 6
        %v939 = vrot.slane %v890, 7
        %v948 = vrcp.pop %v890
        %v949 = vmul.f32 %v780, %v948
        %v950 = vrcp.pop %v933
        %v951 = vmul.f32 %v781, %v950
        %v952 = vrcp.pop %v934
        %v953 = vmul.f32 %v782, %v952
        %v954 = vrcp.pop %v935
        %v955 = vmul.f32 %v783, %v954
        %v956 = vrcp.pop %v936
        %v957 = vmul.f32 %v784, %v956
        %v958 = vrcp.pop %v937
        %v959 = vmul.f32 %v785, %v958
        %v960 = vrcp.pop %v938
        %v961 = vmul.f32 %v786, %v960
        %v962 = vrcp.pop %v939
        %v963 = vmul.f32 %v787, %v962
        %v972 = vrot.slane %v951, 7
        %v973 = vsel %vm866, %v972, %v949
        %v974 = vrot.slane %v953, 6
        %v975 = vsel %vm868, %v974, %v973
        %v976 = vrot.slane %v955, 5
        %v977 = vsel %vm870, %v976, %v975
        %v978 = vrot.slane %v957, 4
        %v979 = vsel %vm872, %v978, %v977
        %v980 = vrot.slane %v959, 3
        %v981 = vsel %vm874, %v980, %v979
        %v982 = vrot.slane %v961, 2
        %v983 = vsel %vm876, %v982, %v981
        %v984 = vrot.slane %v963, 1
        %v985 = vsel %vm878, %v984, %v983
        %987 = vst [vmem:[%s274] sm:$0xff] %v985
        %v989 = vrot.slane %v931, 1
        %v990 = vrot.slane %v931, 2
        %v991 = vrot.slane %v931, 3
        %v992 = vrot.slane %v931, 4
        %v993 = vrot.slane %v931, 5
        %v994 = vrot.slane %v931, 6
        %v995 = vrot.slane %v931, 7
        %v1004 = vrcp.pop %v931
        %v1005 = vmul.f32 %v842, %v1004
        %v1006 = vrcp.pop %v989
        %v1007 = vmul.f32 %v843, %v1006
        %v1008 = vrcp.pop %v990
        %v1009 = vmul.f32 %v844, %v1008
        %v1010 = vrcp.pop %v991
        %v1011 = vmul.f32 %v845, %v1010
        %v1012 = vrcp.pop %v992
        %v1013 = vmul.f32 %v846, %v1012
        %v1014 = vrcp.pop %v993
        %v1015 = vmul.f32 %v847, %v1014
        %v1016 = vrcp.pop %v994
        %v1017 = vmul.f32 %v848, %v1016
        %v1018 = vrcp.pop %v995
        %v1019 = vmul.f32 %v849, %v1018
        %v1028 = vrot.slane %v1007, 7
        %v1029 = vsel %vm866, %v1028, %v1005
        %v1030 = vrot.slane %v1009, 6
        %v1031 = vsel %vm868, %v1030, %v1029
        %v1032 = vrot.slane %v1011, 5
        %v1033 = vsel %vm870, %v1032, %v1031
        %v1034 = vrot.slane %v1013, 4
        %v1035 = vsel %vm872, %v1034, %v1033
        %v1036 = vrot.slane %v1015, 3
        %v1037 = vsel %vm874, %v1036, %v1035
        %v1038 = vrot.slane %v1017, 2
        %v1039 = vsel %vm876, %v1038, %v1037
        %v1040 = vrot.slane %v1019, 1
        %v1041 = vsel %vm878, %v1040, %v1039
        %1043 = vst [vmem:[%s281] sm:$0xff] %v1041
        %s1044 = sand.u32 %s145, 1
        %s1045 = scalar_lea.sflag [#allocation4], %s1044
        %s1046 = sand.u32 %s145, 1
        %s1047 = smul.addr %s1046, 8
        %s1048 = scalar_lea.vmem [#allocation5], %s1047
        %s1049 = sand.u32 %s171, 1
        %s1050 = scalar_lea.sflag [#allocation7], %s1049
        %s1051 = sand.u32 %s171, 1
        %s1052 = smul.addr %s1051, 8
        %s1053 = scalar_lea.vmem [#allocation6], %s1052
        // Predicated region
        $region45: #{tpu_custom_call.1} parent=39 // pred_check
          %p1054 = pneg %p155
        $region46: #{tpu_custom_call.1} parent=39 // pred_check_branch
          %1056 = sbr.rel (%p1054) target = $region48
        $region47: #{tpu_custom_call.1} parent=39 // pred_region
          %s1058 = ssub.s32 128, 128
          %1059 = vsyncadd %s1045, %s1058
          %s1060 = smul.addr %s27, 128
          %s1061 = scalar_lea.hbm %s5, %s1060
          %s1063 = sshll.u32 %s1048, 4
          %s1064 = int_to_ptr.vmem [resolvable:$true] %s1063
          %1066 = dma.vmem_to_hbm [thread:$0]  %s1064, 128, %s1061, %s1045
        $region48: #{tpu_custom_call.1} parent=39 // pred_fallthru
          _
        // Predicated region
        $region49: #{tpu_custom_call.1} parent=39 // pred_check
          %p1067 = pneg %p181
        $region50: #{tpu_custom_call.1} parent=39 // pred_check_branch
          %1069 = sbr.rel (%p1067) target = $region52
        $region51: #{tpu_custom_call.1} parent=39 // pred_region
          %s1071 = ssub.s32 128, 128
          %1072 = vsyncadd %s1050, %s1071
          %s1073 = smul.addr %s27, 128
          %s1074 = scalar_lea.hbm %s6, %s1073
          %s1076 = sshll.u32 %s1053, 4
          %s1077 = int_to_ptr.vmem [resolvable:$true] %s1076
          %1079 = dma.vmem_to_hbm [thread:$0]  %s1077, 128, %s1074, %s1050
        $region52: #{tpu_custom_call.1} parent=39 // pred_fallthru
          _
      $region40: #{tpu_custom_call.1} parent=5 // pred_fallthru
        _
      %p1080 = scmp.le.s32.totalorder 2, %s22
      // Predicated region
      $region53: #{tpu_custom_call.1} parent=5 // pred_check
        %p1081 = pneg %p1080
      $region54: #{tpu_custom_call.1} parent=5 // pred_check_branch
        %1083 = sbr.rel (%p1081) target = $region56
      $region55: #{tpu_custom_call.1} parent=5 // pred_region
        %s1084 = ssub.s32 %s22, 2
        // Predicated region
        $region57: #{tpu_custom_call.1} parent=55 // pred_check
          %p1085 = pneg %p161
        $region58: #{tpu_custom_call.1} parent=55 // pred_check_branch
          %1087 = sbr.rel (%p1085) target = $region60
        $region59: #{tpu_custom_call.1} parent=55 // pred_region
          %s1088 = sand.u32 %s146, 1
          %s1089 = scalar_lea.sflag [#allocation4], %s1088
          %s1090 = sand.u32 %s146, 1
          %s1091 = smul.addr %s1090, 8
          %s1092 = scalar_lea.vmem [#allocation5], %s1091
          %1093 = dma.done %s1089, 128
        $region60: #{tpu_custom_call.1} parent=55 // pred_fallthru
          _
        // Predicated region
        $region61: #{tpu_custom_call.1} parent=55 // pred_check
          %p1094 = pneg %p187
        $region62: #{tpu_custom_call.1} parent=55 // pred_check_branch
          %1096 = sbr.rel (%p1094) target = $region64
        $region63: #{tpu_custom_call.1} parent=55 // pred_region
          %s1097 = sand.u32 %s172, 1
          %s1098 = scalar_lea.sflag [#allocation7], %s1097
          %s1099 = sand.u32 %s172, 1
          %s1100 = smul.addr %s1099, 8
          %s1101 = scalar_lea.vmem [#allocation6], %s1100
          %1102 = dma.done %s1098, 128
        $region64: #{tpu_custom_call.1} parent=55 // pred_fallthru
          _
      $region56: #{tpu_custom_call.1} parent=5 // pred_fallthru
        _
    $region6: #{tpu_custom_call.1} parent=1 // loop_footer
      %s26 = sadd.s32 1, %s22
    $region7: #{tpu_custom_call.1} parent=1 // loop_footer_branch
      %21 = sbr.rel target = $region3
    $region8: #{tpu_custom_call.1} parent=1 // loop_exit
      _
    %1103 = vsyncpa [#allocation3], 1
    %s1104 = scalar_lea.sflag [#allocation3], 1
    %1105 = vsyncpa %s1104, 1
    %1106 = vsyncpa [#allocation4], 1
    %s1107 = scalar_lea.sflag [#allocation4], 1
    %1108 = vsyncpa %s1107, 1
    %1109 = vsyncpa [#allocation7], 1
    %s1110 = scalar_lea.sflag [#allocation7], 1
    %1111 = vsyncpa %s1110, 1

</llo_original>
